<compile_context>
chip_gen: v5e
topology: v5e:2x2
jax: 0.10.0
libtpu: 0.0.40
codegen_flags: <defaults>
</compile_context>

<pallas_src>
import jax
import jax.numpy as jnp
import numpy as np
from jax.experimental import pallas as pl
from jax.experimental.pallas import tpu as pltpu


def _round_up(n, m):
    return ((n + m - 1) // m) * m


def qnet_kernel(x_ref, w1_ref, b1_ref, w2_ref, b2_ref, q_ref):
    """One batch tile: q = relu(x @ W1 + b1) @ W2q + b2q.

    W1:  (state_dim, 2*hidden)   fused [advantage | value] hidden layer (lane-dense, 128 wide)
    W2q: (2*hidden, n_out_pad)   dueling map pre-folded; columns [0, action_num) hold Q, rest zeros.
    """
    h = jnp.dot(x_ref[...], w1_ref[...], preferred_element_type=jnp.float32)
    h = jnp.maximum(h + b1_ref[...], 0.0)                       # bias + ReLU in f32
    q = jnp.dot(h.astype(w2_ref.dtype), w2_ref[...],
                preferred_element_type=jnp.float32) + b2_ref[...]
    q_ref[...] = q.astype(q_ref.dtype)                          # full 128-lane (lane-dense) store


def q_net_forward(x, params, *, tile_batch=2048, matmul_dtype=jnp.bfloat16):
    """Q = V + (A - mean(A)) for x of shape (batch, state_dim)."""
    (w1a, b1a, w2a, b2a, w1v, b1v, w2v, b2v) = params
    batch, state_dim = x.shape
    hidden = w1a.shape[1]
    action_num = w2a.shape[1]

    # ---- fuse weights once in the wrapper (all folding in f32, cast last) ----
    # layer 1: concat along output dim -> (state_dim, 2*hidden) lane-dense hidden
    w1 = jnp.concatenate([w1a, w1v], axis=1).astype(jnp.float32)
    b1 = jnp.concatenate([b1a, b1v], axis=1).astype(jnp.float32)

    # layer 2 + dueling fold:  Q = V + A - mean(A)  ==  [h_a | h_v] @ W2q + b2q
    #   A part: w2a @ M  with M = I - (1/A) * ones  (centers the advantage columns)
    #   V part: w2v tiled across all action columns (broadcasts the state value)
    A = action_num
    M = jnp.eye(A, dtype=jnp.float32) - jnp.full((A, A), 1.0 / A, dtype=jnp.float32)
    w2a_q = w2a.astype(jnp.float32) @ M                         # (hidden, A)
    w2v_q = jnp.tile(w2v.astype(jnp.float32), (1, A))           # (hidden, A)
    b2_q = b2a.astype(jnp.float32) @ M + b2v.astype(jnp.float32)  # (1, A), b2v broadcasts

    n_out_pad = max(128, _round_up(A, 128))                     # lane-dense output width
    w2 = jnp.zeros((2 * hidden, n_out_pad), jnp.float32)
    w2 = w2.at[:hidden, :A].set(w2a_q)
    w2 = w2.at[hidden:, :A].set(w2v_q)
    b2 = jnp.zeros((1, n_out_pad), jnp.float32)
    b2 = b2.at[:, :A].set(b2_q)

    # bf16 operands are MXU-native on v5e/v6e/v7x and halve x's HBM/VMEM footprint;
    # accumulation stays f32 (preferred_element_type); biases / ReLU stay f32.
    is_bf16 = jnp.dtype(matmul_dtype) == jnp.dtype(jnp.bfloat16)
    x_c = x.astype(matmul_dtype)
    w1 = w1.astype(matmul_dtype)
    w2 = w2.astype(matmul_dtype)

    # ---- batch tiling (weights stay resident in VMEM across grid steps) ----
    sub = 16 if is_bf16 else 8                                  # sublane multiple (bf16 packs 16)
    tb = max(sub, (min(tile_batch, _round_up(batch, sub)) // sub) * sub)
    # Ensure >=2 grid tiles when the batch allows it, so v7x's two TensorCores both run.
    b_round = _round_up(batch, sub)
    if b_round >= 2 * sub:
        half = _round_up((b_round + 1) // 2, sub)
        if tb > half:
            tb = half
    b_pad = _round_up(batch, tb)
    if b_pad != batch:
        x_c = jnp.pad(x_c, ((0, b_pad - batch), (0, 0)))
    grid = (b_pad // tb,)

    itemsize = jnp.dtype(matmul_dtype).itemsize
    cost = pl.CostEstimate(
        flops=2 * b_pad * (state_dim * 2 * hidden + 2 * hidden * n_out_pad),
        transcendentals=0,
        bytes_accessed=(b_pad * state_dim * itemsize            # x
                        + b_pad * n_out_pad * 4                 # q (f32 out)
                        + (w1.size + w2.size) * itemsize
                        + (b1.size + b2.size) * 4),
    )

    q_pad = pl.pallas_call(
        qnet_kernel,
        out_shape=jax.ShapeDtypeStruct((b_pad, n_out_pad), jnp.float32),
        grid_spec=pltpu.PrefetchScalarGridSpec(
            num_scalar_prefetch=0,
            grid=grid,
            in_specs=[
                pl.BlockSpec((tb, state_dim), lambda i: (i, 0)),          # x: tiled over batch
                pl.BlockSpec((state_dim, 2 * hidden), lambda i: (0, 0)),  # fused W1 (resident)
                pl.BlockSpec((1, 2 * hidden), lambda i: (0, 0)),          # fused b1 (resident)
                pl.BlockSpec((2 * hidden, n_out_pad), lambda i: (0, 0)),  # folded W2q (resident)
                pl.BlockSpec((1, n_out_pad), lambda i: (0, 0)),           # folded b2q (resident)
            ],
            out_specs=pl.BlockSpec((tb, n_out_pad), lambda i: (i, 0)),    # lane-dense 128-wide out
        ),
        compiler_params=pltpu.CompilerParams(
            dimension_semantics=("parallel",),  # batch tiles independent -> v7x dual-TC sharding
        ),
        cost_estimate=cost,
    )(x_c, w1, b1, w2, b2)

    return q_pad[:batch, :action_num]


def make_params(key, state_dim, hidden, action_num):
    ks = jax.random.split(key, 8)
    # Weights stored as (in, out); biases as (1, out) for 2-D TPU-friendly broadcast.
    w1a = jax.random.normal(ks[0], (state_dim, hidden), jnp.float32) * 0.1
    b1a = jax.random.normal(ks[1], (1, hidden), jnp.float32) * 0.1
    w2a = jax.random.normal(ks[2], (hidden, action_num), jnp.float32) * 0.1
    b2a = jax.random.normal(ks[3], (1, action_num), jnp.float32) * 0.1
    w1v = jax.random.normal(ks[4], (state_dim, hidden), jnp.float32) * 0.1
    b1v = jax.random.normal(ks[5], (1, hidden), jnp.float32) * 0.1
    w2v = jax.random.normal(ks[6], (hidden, 1), jnp.float32) * 0.1
    b2v = jax.random.normal(ks[7], (1, 1), jnp.float32) * 0.1
    return (w1a, b1a, w2a, b2a, w1v, b1v, w2v, b2v)


def q_net_reference(x, params):
    (w1a, b1a, w2a, b2a, w1v, b1v, w2v, b2v) = params
    adv = jnp.maximum(x @ w1a + b1a, 0.0) @ w2a + b2a
    val = jnp.maximum(x @ w1v + b1v, 0.0) @ w2v + b2v
    return val + (adv - jnp.mean(adv, axis=1, keepdims=True))


if __name__ == "__main__":
    key = jax.random.PRNGKey(0)
    k_x, k_p, k_x2 = jax.random.split(key, 3)

    batch, state_dim, hidden, action_num = 8, 32, 64, 8
    x = jax.random.normal(k_x, (batch, state_dim), jnp.float32)
    params = make_params(k_p, state_dim, hidden, action_num)

    # f32 matmul path — tight correctness check against the pure-JAX reference.
    q = q_net_forward(x, params, matmul_dtype=jnp.float32)
    jax.block_until_ready(q)
    q_ref = q_net_reference(x, params)
    np.testing.assert_allclose(np.asarray(q), np.asarray(q_ref), rtol=1e-4, atol=1e-4)

    # Default bf16 operands (MXU-native, f32 accumulate) — loose check vs f32 reference.
    # NOTE: bf16 operands are intended for RL inference; use matmul_dtype=jnp.float32 for
    # training-side exactness.
    q_bf16 = q_net_forward(x, params)
    jax.block_until_ready(q_bf16)
    np.testing.assert_allclose(np.asarray(q_bf16), np.asarray(q_ref), rtol=5e-2, atol=5e-2)

    # Larger, non-multiple batch to exercise batch tiling, >=2-tile grid, padding, slicing.
    batch2 = 300
    x2 = jax.random.normal(k_x2, (batch2, state_dim), jnp.float32)
    q2 = q_net_forward(x2, params, tile_batch=128, matmul_dtype=jnp.float32)
    jax.block_until_ready(q2)
    q2_ref = q_net_reference(x2, params)
    np.testing.assert_allclose(np.asarray(q2), np.asarray(q2_ref), rtol=1e-4, atol=1e-4)

    print("KERNEL_OK")
</pallas_src>

<mosaic_0001>
module attributes {stable_mosaic.version = 11 : i64} {
  func.func @qnet_kernel(%arg0: i32, %arg1: memref<8x32xf32, #tpu.memory_space<vmem>>, %arg2: memref<32x128xf32, #tpu.memory_space<vmem>>, %arg3: memref<1x128xf32, #tpu.memory_space<vmem>>, %arg4: memref<128x128xf32, #tpu.memory_space<vmem>>, %arg5: memref<1x128xf32, #tpu.memory_space<vmem>>, %arg6: memref<8x128xf32, #tpu.memory_space<vmem>>) attributes {dimension_semantics = [#tpu.dimension_semantics<parallel>], iteration_bounds = array<i64: 1>, scalar_prefetch = 0 : i64, scratch_operands = 0 : i64, tpu.core_type = #tpu.core_type<tc>, window_params = [{transform_indices = @transform_0, window_bounds = array<i64: 8, 32>}, {pipeline_mode = #tpu.pipeline_mode<synchronous>, transform_indices = @transform_1, window_bounds = array<i64: 32, 128>}, {pipeline_mode = #tpu.pipeline_mode<synchronous>, transform_indices = @transform_2, window_bounds = array<i64: 1, 128>}, {pipeline_mode = #tpu.pipeline_mode<synchronous>, transform_indices = @transform_3, window_bounds = array<i64: 128, 128>}, {pipeline_mode = #tpu.pipeline_mode<synchronous>, transform_indices = @transform_4, window_bounds = array<i64: 1, 128>}, {transform_indices = @transform_5, window_bounds = array<i64: 8, 128>}]} {
    %c0 = arith.constant 0 : index
    %c0_0 = arith.constant 0 : index
    %0 = vector.load %arg1[%c0, %c0_0] : memref<8x32xf32, #tpu.memory_space<vmem>>, vector<8x32xf32>
    %c0_1 = arith.constant 0 : index
    %c0_2 = arith.constant 0 : index
    %1 = vector.load %arg2[%c0_1, %c0_2] : memref<32x128xf32, #tpu.memory_space<vmem>>, vector<32x128xf32>
    %cst = arith.constant dense<0.000000e+00> : vector<8x128xf32>
    %2 = tpu.matmul %0, %1, %cst {dimension_numbers = #tpu.dot_dimension_numbers<[1], [0], [0], [1], [0, 0, 1, 1], [], []>} : vector<8x32xf32>, vector<32x128xf32>, vector<8x128xf32> -> vector<8x128xf32>
    %c0_3 = arith.constant 0 : index
    %c0_4 = arith.constant 0 : index
    %3 = vector.load %arg3[%c0_3, %c0_4] : memref<1x128xf32, #tpu.memory_space<vmem>>, vector<1x128xf32>
    %4 = vector.broadcast %3 : vector<1x128xf32> to vector<8x128xf32>
    %5 = arith.addf %2, %4 : vector<8x128xf32>
    %cst_5 = arith.constant 0.000000e+00 : f32
    %6 = vector.broadcast %cst_5 : f32 to vector<8x128xf32>
    %7 = arith.maximumf %5, %6 : vector<8x128xf32>
    %c0_6 = arith.constant 0 : index
    %c0_7 = arith.constant 0 : index
    %8 = vector.load %arg4[%c0_6, %c0_7] : memref<128x128xf32, #tpu.memory_space<vmem>>, vector<128x128xf32>
    %cst_8 = arith.constant dense<0.000000e+00> : vector<8x128xf32>
    %9 = tpu.matmul %7, %8, %cst_8 {dimension_numbers = #tpu.dot_dimension_numbers<[1], [0], [0], [1], [0, 0, 1, 1], [], []>} : vector<8x128xf32>, vector<128x128xf32>, vector<8x128xf32> -> vector<8x128xf32>
    %c0_9 = arith.constant 0 : index
    %c0_10 = arith.constant 0 : index
    %10 = vector.load %arg5[%c0_9, %c0_10] : memref<1x128xf32, #tpu.memory_space<vmem>>, vector<1x128xf32>
    %11 = vector.broadcast %10 : vector<1x128xf32> to vector<8x128xf32>
    %12 = arith.addf %9, %11 : vector<8x128xf32>
    %c0_11 = arith.constant 0 : index
    %c0_12 = arith.constant 0 : index
    %13 = vector.load %arg6[%c0_11, %c0_12] : memref<8x128xf32, #tpu.memory_space<vmem>>, vector<8x128xf32>
    tpu.vector_store %arg6[%c0_11, %c0_12], %12 {strides = array<i32>} : memref<8x128xf32, #tpu.memory_space<vmem>>, vector<8x128xf32>,
    return
  }
  func.func @transform_0(%arg0: i32) -> (i32, i32) {
    %c0_i32 = arith.constant 0 : i32
    %c0_i32_0 = arith.constant 0 : i32
    return %arg0, %c0_i32 : i32, i32
  }
  func.func @transform_1(%arg0: i32) -> (i32, i32) {
    %c0_i32 = arith.constant 0 : i32
    %c0_i32_0 = arith.constant 0 : i32
    %c0_i32_1 = arith.constant 0 : i32
    return %c0_i32, %c0_i32_0 : i32, i32
  }
  func.func @transform_2(%arg0: i32) -> (i32, i32) {
    %c0_i32 = arith.constant 0 : i32
    %c0_i32_0 = arith.constant 0 : i32
    %c0_i32_1 = arith.constant 0 : i32
    return %c0_i32, %c0_i32_0 : i32, i32
  }
  func.func @transform_3(%arg0: i32) -> (i32, i32) {
    %c0_i32 = arith.constant 0 : i32
    %c0_i32_0 = arith.constant 0 : i32
    %c0_i32_1 = arith.constant 0 : i32
    return %c0_i32, %c0_i32_0 : i32, i32
  }
  func.func @transform_4(%arg0: i32) -> (i32, i32) {
    %c0_i32 = arith.constant 0 : i32
    %c0_i32_0 = arith.constant 0 : i32
    %c0_i32_1 = arith.constant 0 : i32
    return %c0_i32, %c0_i32_0 : i32, i32
  }
  func.func @transform_5(%arg0: i32) -> (i32, i32) {
    %c0_i32 = arith.constant 0 : i32
    %c0_i32_0 = arith.constant 0 : i32
    return %arg0, %c0_i32 : i32, i32
  }
}

</mosaic_0001>

<llo_original>
// kernel: tpu_custom_call.1
$region0: #{tpu_custom_call.1}
  #allocation0 [shape = 'u32[]', space=smem, size = 0x4, offset = 0x4, fixed_abs, tag = 'smem constant byte address 0x4 - core index']
  #allocation1 [shape = 'u32[72,128]{1,0:T(1,128)}', space=vmem, size = 0x9000, scoped, tag = 'internal scratch']
  %s0 = inlined_call_operand.hbm [shape: f32[8,32], index: 0, kind: input, shape index: {}]
  %s1 = inlined_call_operand.hbm [shape: f32[32,128], index: 1, kind: input, shape index: {}]
  %s2 = inlined_call_operand.vmem [shape: f32[1,128], index: 2, kind: input, shape index: {}]
  %s3 = inlined_call_operand.hbm [shape: f32[128,128], index: 3, kind: input, shape index: {}]
  %s4 = inlined_call_operand.vmem [shape: f32[1,128], index: 4, kind: input, shape index: {}]
  %s5 = inlined_call_operand.hbm [shape: f32[8,128], index: 5, kind: output, shape index: {}]
  %s6 = sld [smem:[#allocation0]]
  $region42: #{tpu_custom_call.1} parent=0
    _
  %s8 = ssub.s32 1, %s6
  %s9 = scalar_select 0, %s8, %s6
  $region1: #{tpu_custom_call.1} parent=0
    #allocation2 [shape = 'u8[4096]{0}', space=vmem, size = 0x1000, scoped, tag = 'input window, operand 0, single buffered']
    #allocation3 [shape = 's32[1]{0}', space=sflag, size = 0x4, scoped, tag = 'scoped memory for tpu_custom_call.1']
    #allocation4 [shape = 's32[1]{0}', space=sflag, size = 0x4, scoped, tag = 'scoped memory for tpu_custom_call.1']
    #allocation5 [shape = 'u8[16384]{0}', space=vmem, size = 0x4000, scoped, tag = 'input window, operand 1, single buffered']
    #allocation6 [shape = 's32[1]{0}', space=sflag, size = 0x4, scoped, tag = 'scoped memory for tpu_custom_call.1']
    #allocation7 [shape = 'u8[65536]{0}', space=vmem, size = 0x10000, scoped, tag = 'input window, operand 3, single buffered']
    #allocation8 [shape = 'u8[4096]{0}', space=vmem, size = 0x1000, scoped, tag = 'output window, operand 0, single buffered']
    %10 = vsyncpa [#allocation3], 0
    %11 = vsyncpa [#allocation6], 0
    %12 = vsyncpa [#allocation4], 0
    // Predicated region
    $region2: #{tpu_custom_call.1} parent=1 // pred_check
      _
    $region3: #{tpu_custom_call.1} parent=1 // pred_check_branch
      %14 = sbr.rel (0) target = $region5
    $region4: #{tpu_custom_call.1} parent=1 // pred_region
      %16 = vsyncadd [#allocation3], 0
      %s18 = sshll.u32 %s0, 4
      %s19 = int_to_ptr.hbm [resolvable:$true] %s18
      %s20 = sshll.u32 [#allocation2], 4
      %s21 = int_to_ptr.vmem [resolvable:$true] %s20
      %23 = dma.hbm_to_vmem [thread:$0]  %s19, 128, %s21, [#allocation3]
    $region5: #{tpu_custom_call.1} parent=1 // pred_fallthru
      _
    // Predicated region
    $region6: #{tpu_custom_call.1} parent=1 // pred_check
      _
    $region7: #{tpu_custom_call.1} parent=1 // pred_check_branch
      %25 = sbr.rel (0) target = $region9
    $region8: #{tpu_custom_call.1} parent=1 // pred_region
      %27 = vsyncadd [#allocation6], 0
      %s28 = sshll.u32 %s1, 4
      %s29 = int_to_ptr.hbm [resolvable:$true] %s28
      %s30 = sshll.u32 [#allocation5], 4
      %s31 = int_to_ptr.vmem [resolvable:$true] %s30
      %36 = dma.hbm_to_vmem [thread:$0]  %s29, 512, %s31, [#allocation6], 128, 128, 8
    $region9: #{tpu_custom_call.1} parent=1 // pred_fallthru
      _
    // Predicated region
    $region10: #{tpu_custom_call.1} parent=1 // pred_check
      _
    $region11: #{tpu_custom_call.1} parent=1 // pred_check_branch
      %38 = sbr.rel (0) target = $region13
    $region12: #{tpu_custom_call.1} parent=1 // pred_region
      _
    $region13: #{tpu_custom_call.1} parent=1 // pred_fallthru
      _
    // Predicated region
    $region14: #{tpu_custom_call.1} parent=1 // pred_check
      _
    $region15: #{tpu_custom_call.1} parent=1 // pred_check_branch
      %40 = sbr.rel (0) target = $region17
    $region16: #{tpu_custom_call.1} parent=1 // pred_region
      %42 = vsyncadd [#allocation6], 0
      %s43 = sshll.u32 %s3, 4
      %s44 = int_to_ptr.hbm [resolvable:$true] %s43
      %s45 = sshll.u32 [#allocation7], 4
      %s46 = int_to_ptr.vmem [resolvable:$true] %s45
      %51 = dma.hbm_to_vmem [thread:$0]  %s44, 2048, %s46, [#allocation6], 128, 128, 8
    $region17: #{tpu_custom_call.1} parent=1 // pred_fallthru
      _
    // Predicated region
    $region18: #{tpu_custom_call.1} parent=1 // pred_check
      _
    $region19: #{tpu_custom_call.1} parent=1 // pred_check_branch
      %53 = sbr.rel (0) target = $region21
    $region20: #{tpu_custom_call.1} parent=1 // pred_region
      _
    $region21: #{tpu_custom_call.1} parent=1 // pred_fallthru
      _
    // Predicated region
    $region22: #{tpu_custom_call.1} parent=1 // pred_check
      _
    $region23: #{tpu_custom_call.1} parent=1 // pred_check_branch
      %55 = sbr.rel (0) target = $region25
    $region24: #{tpu_custom_call.1} parent=1 // pred_region
      %57 = dma.done [#allocation3], 128
    $region25: #{tpu_custom_call.1} parent=1 // pred_fallthru
      _
    // Predicated region
    $region26: #{tpu_custom_call.1} parent=1 // pred_check
      _
    $region27: #{tpu_custom_call.1} parent=1 // pred_check_branch
      %59 = sbr.rel (0) target = $region29
    $region28: #{tpu_custom_call.1} parent=1 // pred_region
      %61 = dma.done [#allocation6], 512
    $region29: #{tpu_custom_call.1} parent=1 // pred_fallthru
      _
    // Predicated region
    $region30: #{tpu_custom_call.1} parent=1 // pred_check
      _
    $region31: #{tpu_custom_call.1} parent=1 // pred_check_branch
      %63 = sbr.rel (0) target = $region33
    $region32: #{tpu_custom_call.1} parent=1 // pred_region
      %65 = dma.done [#allocation6], 2048
    $region33: #{tpu_custom_call.1} parent=1 // pred_fallthru
      _
    %v66 = vld [vmem:[#allocation2] sm:$0xff]
    %v67 = vld [vmem:[#allocation5] sm:$0xff]
    %v68 = vld [vmem:[#allocation5 + $0x8] sm:$0xff]
    %v69 = vld [vmem:[#allocation5 + $0x10] sm:$0xff]
    %v70 = vld [vmem:[#allocation5 + $0x18] sm:$0xff]
    %v71 = vld [vmem:[%s2] sm:$0x1]
    %v73 = vperm.slane %v71, 0
    %vm75 = vcmask 261120
    %v77 = vsel %vm75, %v66, 0
    %79 = vmatpush.msra.mxu0 0.0
    %80 = vmatpush.msra.mxu0 0.0
    %81 = vmatpush.msra.mxu0 0.0
    %82 = vmatpush.msra.mxu0 0.0
    %83 = vmatpush.msra.mxu0 0.0
    %84 = vmatpush.msra.mxu0 0.0
    %85 = vmatpush.msra.mxu0 0.0
    %86 = vmatpush.msra.mxu0 0.0
    %87 = vmatpush.msra.mxu0 0.0
    %88 = vmatpush.msra.mxu0 0.0
    %89 = vmatpush.msra.mxu0 0.0
    %90 = vmatpush.msra.mxu0 0.0
    %91 = vmatpush.msra.mxu0 %v70
    %92 = vmatpush.msra.mxu0 %v69
    %93 = vmatpush.msra.mxu0 %v68
    %94 = vmatpush.msra.mxu0 %v67
    %95 = vmatmul.f32.gmra.mxu0 %v77
    %v96 = vpop.f32.mrf.mxu0
    %v97 = vadd.f32 %v73, %v96
    %98 = vdwg.mxu0
    %v99 = vmax.f32 %v97, 0.0
    %v100 = vld [vmem:[#allocation7] sm:$0xff]
    %v101 = vld [vmem:[#allocation7 + $0x8] sm:$0xff]
    %v102 = vld [vmem:[#allocation7 + $0x10] sm:$0xff]
    %v103 = vld [vmem:[#allocation7 + $0x18] sm:$0xff]
    %v104 = vld [vmem:[#allocation7 + $0x20] sm:$0xff]
    %v105 = vld [vmem:[#allocation7 + $0x28] sm:$0xff]
    %v106 = vld [vmem:[#allocation7 + $0x30] sm:$0xff]
    %v107 = vld [vmem:[#allocation7 + $0x38] sm:$0xff]
    %v108 = vld [vmem:[#allocation7 + $0x40] sm:$0xff]
    %v109 = vld [vmem:[#allocation7 + $0x48] sm:$0xff]
    %v110 = vld [vmem:[#allocation7 + $0x50] sm:$0xff]
    %v111 = vld [vmem:[#allocation7 + $0x58] sm:$0xff]
    %v112 = vld [vmem:[#allocation7 + $0x60] sm:$0xff]
    %v113 = vld [vmem:[#allocation7 + $0x68] sm:$0xff]
    %v114 = vld [vmem:[#allocation7 + $0x70] sm:$0xff]
    %v115 = vld [vmem:[#allocation7 + $0x78] sm:$0xff]
    %v116 = vld [vmem:[%s4] sm:$0x1]
    %v118 = vperm.slane %v116, 0
    %120 = vmatpush.msra.mxu0 %v115
    %121 = vmatpush.msra.mxu0 %v114
    %122 = vmatpush.msra.mxu0 %v113
    %123 = vmatpush.msra.mxu0 %v112
    %124 = vmatpush.msra.mxu0 %v111
    %125 = vmatpush.msra.mxu0 %v110
    %126 = vmatpush.msra.mxu0 %v109
    %127 = vmatpush.msra.mxu0 %v108
    %128 = vmatpush.msra.mxu0 %v107
    %129 = vmatpush.msra.mxu0 %v106
    %130 = vmatpush.msra.mxu0 %v105
    %131 = vmatpush.msra.mxu0 %v104
    %132 = vmatpush.msra.mxu0 %v103
    %133 = vmatpush.msra.mxu0 %v102
    %134 = vmatpush.msra.mxu0 %v101
    %135 = vmatpush.msra.mxu0 %v100
    %136 = vmatmul.f32.gmra.mxu0 %v99
    %v137 = vpop.f32.mrf.mxu0
    %v138 = vadd.f32 %v118, %v137
    %139 = vdwg.mxu0
    %140 = vst [vmem:[#allocation8] sm:$0xff] %v138
    // Predicated region
    $region34: #{tpu_custom_call.1} parent=1 // pred_check
      _
    $region35: #{tpu_custom_call.1} parent=1 // pred_check_branch
      %142 = sbr.rel (0) target = $region37
    $region36: #{tpu_custom_call.1} parent=1 // pred_region
      %144 = vsyncadd [#allocation4], 0
      %s146 = sshll.u32 [#allocation8], 4
      %s147 = int_to_ptr.vmem [resolvable:$true] %s146
      %s148 = sshll.u32 %s5, 4
      %s149 = int_to_ptr.hbm [resolvable:$true] %s148
      %151 = dma.vmem_to_hbm [thread:$0]  %s147, 128, %s149, [#allocation4]
    $region37: #{tpu_custom_call.1} parent=1 // pred_fallthru
      _
    // Predicated region
    $region38: #{tpu_custom_call.1} parent=1 // pred_check
      _
    $region39: #{tpu_custom_call.1} parent=1 // pred_check_branch
      %153 = sbr.rel (0) target = $region41
    $region40: #{tpu_custom_call.1} parent=1 // pred_region
      %155 = dma.done [#allocation4], 128
    $region41: #{tpu_custom_call.1} parent=1 // pred_fallthru
      _
    %156 = vsyncpa [#allocation3], 1
    %157 = vsyncpa [#allocation6], 1
    %158 = vsyncpa [#allocation4], 1

</llo_original>
